<compile_context>
chip_gen: v7x
topology: tpu7x:2x2x1
jax: 0.10.0
libtpu: 0.0.40
codegen_flags: <defaults>
</compile_context>

<pallas_src>
import functools
import math

import jax
import jax.numpy as jnp
from jax.experimental import pallas as pl
from jax.experimental.pallas import tpu as pltpu


def _round_up(x, m):
    return ((x + m - 1) // m) * m


# ---------------------------------------------------------------------------
# Parameters
# ---------------------------------------------------------------------------
def init_condnet_params(key, in_dim, cond_dim, out_dim, hidden_layer=2,
                        hidden_dim=64, cond_type="cat"):
    """nn.Linear-style init (uniform +-1/sqrt(fan_in)).

    Returns (main_params, film_params); each is a flat [w0, b0, w1, b1, ...]
    list with w: [in, out] in bfloat16 (MXU input dtype), b: [1, out] in float32.
    film_params is empty unless cond_type == 'film'.
    """
    cond_type = cond_type.lower()

    def linear(k, fan_in, fan_out):
        kw, kb = jax.random.split(k)
        bound = 1.0 / math.sqrt(fan_in)
        w = jax.random.uniform(kw, (fan_in, fan_out), jnp.float32, -bound, bound)
        b = jax.random.uniform(kb, (1, fan_out), jnp.float32, -bound, bound)
        return w.astype(jnp.bfloat16), b

    extra = cond_dim if cond_type == "concat" else 0
    in_dims = [in_dim + extra] + [hidden_dim + extra] * hidden_layer
    out_dims = [hidden_dim] * hidden_layer + [out_dim]

    main = []
    for fi, fo in zip(in_dims, out_dims):
        key, k = jax.random.split(key)
        w, b = linear(k, fi, fo)
        main.extend([w, b])

    film = []
    if cond_type == "film":
        # FCNet(cond_dim, 2*hidden_layer, hidden_layer=1, hidden_dim)
        for fi, fo in [(cond_dim, hidden_dim), (hidden_dim, 2 * hidden_layer)]:
            key, k = jax.random.split(key)
            w, b = linear(k, fi, fo)
            film.extend([w, b])
    return main, film


# ---------------------------------------------------------------------------
# Kernel
# ---------------------------------------------------------------------------
def _make_condnet_kernel(cond_type, hidden_layer):
    """Fused forward kernel.  Ref layout:
         cat:    (x,    w0,b0,...,wL,bL,                 out)
         concat: (x, z, w0x,w0z,b0,...,wLx,wLz,bL,       out)
         film:   (x, z, w0,b0,...,wL,bL, wf0,bf0,wf1,bf1,out)
    """
    n_main = hidden_layer + 1

    def kernel(*refs):
        o_ref = refs[-1]
        if cond_type == "cat":
            x_ref = refs[0]
            wb = refs[1:-1]
        else:
            x_ref, z_ref = refs[0], refs[1]
            wb = refs[2:-1]

        def mm(h, w_ref):
            # bf16 MXU inputs, f32 accumulation.
            return jnp.dot(h.astype(jnp.bfloat16), w_ref[...],
                           preferred_element_type=jnp.float32)

        h = x_ref[...].astype(jnp.float32)

        if cond_type == "film":
            wf0, b_f0, wf1, b_f1 = wb[2 * n_main:2 * n_main + 4]
            zf = z_ref[...].astype(jnp.float32)
            film = mm(zf, wf0) + b_f0[...]
            film = jnp.maximum(film, 0.0)          # FCNet default: ReLU
            film = mm(film, wf1) + b_f1[...]       # [tile, 2*hidden_layer]

        if cond_type == "concat":
            z = z_ref[...].astype(jnp.float32)
            for li in range(n_main):
                wx, wz, b = wb[3 * li], wb[3 * li + 1], wb[3 * li + 2]
                # cat([h, z]) @ W  ==  h @ W_x + z @ W_z  (weights pre-split)
                h = mm(h, wx) + mm(z, wz) + b[...]
                if li < n_main - 1:
                    h = jnp.tanh(h)
        else:
            for li in range(n_main):
                w, b = wb[2 * li], wb[2 * li + 1]
                h = mm(h, w) + b[...]
                if li < n_main - 1:
                    if cond_type == "film":
                        # Columns [0:L) are gammas, [L:2L) are betas (== th.split order).
                        gamma = film[:, li:li + 1]
                        beta = film[:, hidden_layer + li:hidden_layer + li + 1]
                        h = gamma * h + beta
                    h = jnp.tanh(h)

        o_ref[...] = h.astype(o_ref.dtype)

    return kernel


def _choose_batch_tile(batch, batch_tile):
    """Pick a batch tile (multiple of 8 sublanes).

    Heuristic when batch_tile is None: aim for ~8 grid steps (so the 'parallel'
    batch axis can split across v7x's two TensorCores and still pipeline), never
    below 128 rows/step, capped at 8192 rows (VMEM footprint stays tiny; the cap
    only keeps the DMA granularity sane).  Small batches collapse to one tile.
    """
    full = _round_up(batch, 8)
    if batch_tile is None:
        bt = _round_up(pl.cdiv(batch, 8), 8)   # ~8 steps
        bt = max(bt, 128)                      # floor: don't shred tiny batches
        bt = min(bt, 8192)                     # cap
    else:
        bt = _round_up(batch_tile, 8)
    return min(bt, full)


# ---------------------------------------------------------------------------
# Wrapper
# ---------------------------------------------------------------------------
@functools.partial(
    jax.jit,
    static_argnames=("cond_type", "hidden_layer", "batch_tile", "out_dtype"))
def condnet_forward(x, z, main_params, film_params, *,
                    cond_type="cat", hidden_layer=2, batch_tile=None,
                    out_dtype=jnp.float32):
    """CondNet forward.  x: [batch, in_dim] f32, z: [batch, cond_dim] f32."""
    cond_type = cond_type.lower()
    n_main = hidden_layer + 1
    assert len(main_params) == 2 * n_main

    batch, in_dim = x.shape
    out_dim = main_params[-1].shape[-1]
    hidden_dim = main_params[1].shape[-1]
    use_z = cond_type in ("concat", "film")

    bt = _choose_batch_tile(batch, batch_tile)
    grid = (pl.cdiv(batch, bt),)   # last tile OOB rows are masked by Pallas

    # Pack kernel params (no output padding: block last-dim == full array dim).
    main = list(main_params)
    if cond_type == "concat":
        cond_dim = z.shape[-1]
        kparams = []
        for li in range(n_main):
            w, b = main[2 * li], main[2 * li + 1]
            kparams.extend([w[:-cond_dim], w[-cond_dim:], b])
    elif cond_type == "film":
        kparams = main + list(film_params)
    else:  # 'cat' — z is ignored, exactly like the PyTorch module
        kparams = main

    kernel = _make_condnet_kernel(cond_type, hidden_layer)

    x_spec = pl.BlockSpec((bt, in_dim), lambda i: (i, 0))
    # Constant index_map -> fetched once, resident across the whole grid.
    wb_specs = [pl.BlockSpec(p.shape, lambda i: (0, 0)) for p in kparams]
    out_spec = pl.BlockSpec((bt, out_dim), lambda i: (i, 0))

    in_specs, inputs = [x_spec], [x]
    if use_z:
        in_specs.append(pl.BlockSpec((bt, z.shape[-1]), lambda i: (i, 0)))
        inputs.append(z)
    in_specs += wb_specs
    inputs += kparams

    out_itemsize = jnp.dtype(out_dtype).itemsize
    flops = int(sum(2 * batch * p.shape[0] * p.shape[1]
                    for p in kparams if p.ndim == 2 and p.shape[0] > 1))
    transcendentals = int(batch * hidden_dim * hidden_layer)   # tanh (EUP)
    bytes_accessed = int(sum(int(p.size) * p.dtype.itemsize for p in inputs)
                         + batch * out_dim * out_itemsize)

    out = pl.pallas_call(
        kernel,
        out_shape=jax.ShapeDtypeStruct((batch, out_dim), out_dtype),
        grid_spec=pltpu.PrefetchScalarGridSpec(
            num_scalar_prefetch=0,
            grid=grid,
            in_specs=in_specs,
            out_specs=out_spec,
        ),
        compiler_params=pltpu.CompilerParams(
            dimension_semantics=("parallel",),
            # VMEM footprint is tiny at these widths even with bt=8192; no need
            # to raise vmem_limit_bytes unless hidden_dim/out_dim grow a lot.
        ),
        cost_estimate=pl.CostEstimate(
            flops=flops, transcendentals=transcendentals,
            bytes_accessed=bytes_accessed),
    )(*inputs)

    return out


# ---------------------------------------------------------------------------
# Pure-JAX reference (matches the PyTorch forward)
# ---------------------------------------------------------------------------
def condnet_ref(x, z, main_params, film_params, cond_type="cat",
                hidden_layer=2, matmul_dtype=jnp.float32):
    def mm(a, w):
        return jnp.dot(a.astype(matmul_dtype), w.astype(matmul_dtype),
                       preferred_element_type=jnp.float32)

    n_main = hidden_layer + 1
    h = x.astype(jnp.float32)

    if cond_type == "film":
        wf0, b_f0, wf1, b_f1 = film_params
        f = jnp.maximum(mm(z.astype(jnp.float32), wf0) + b_f0, 0.0)
        f = mm(f, wf1) + b_f1

    zc = z.astype(jnp.float32) if cond_type == "concat" else None
    for li in range(n_main):
        w, b = main_params[2 * li], main_params[2 * li + 1]
        hin = jnp.concatenate([h, zc], axis=-1) if cond_type == "concat" else h
        h = mm(hin, w) + b
        if li < n_main - 1:
            if cond_type == "film":
                h = f[:, li:li + 1] * h + f[:, hidden_layer + li:hidden_layer + li + 1]
            h = jnp.tanh(h)
    return h


if __name__ == "__main__":
    # Small shapes consistent with CondNet(in_dim, cond_dim, out_dim,
    # hidden_layer=2, hidden_dim=64).  batch=96 is deliberately NOT a multiple
    # of the explicit 64-row tile so the masked last-tile path is exercised.
    batch = 96
    in_dim, cond_dim, out_dim = 32, 8, 16
    hidden_layer, hidden_dim = 2, 64

    key = jax.random.PRNGKey(0)
    key, kx, kz = jax.random.split(key, 3)
    x = jax.random.normal(kx, (batch, in_dim), jnp.float32)
    z = jax.random.normal(kz, (batch, cond_dim), jnp.float32)

    for cond_type in ("cat", "concat", "film"):
        key, kp = jax.random.split(key)
        main, film = init_condnet_params(kp, in_dim, cond_dim, out_dim,
                                         hidden_layer, hidden_dim, cond_type)

        # Matches a reference using the same bf16 MXU inputs (f32 accumulation).
        ref_bf16 = condnet_ref(x, z, main, film, cond_type, hidden_layer,
                               matmul_dtype=jnp.bfloat16)
        ref_f32 = condnet_ref(x, z, main, film, cond_type, hidden_layer,
                              matmul_dtype=jnp.float32)

        for bt in (None, 64):   # auto tile (single step) and a non-dividing tile
            out = condnet_forward(x, z, main, film, cond_type=cond_type,
                                  hidden_layer=hidden_layer, batch_tile=bt)
            out = jax.block_until_ready(out)
            assert out.shape == (batch, out_dim)
            assert jnp.allclose(out, ref_bf16, atol=1e-2, rtol=1e-2), (cond_type, bt)
            # Loose check vs the f32 reference (bf16 matmul inputs diverge slightly).
            assert jnp.allclose(out, ref_f32, atol=1e-1, rtol=1e-1), (cond_type, bt)

    print("KERNEL_OK")
</pallas_src>

<mosaic_0001>
module attributes {stable_mosaic.version = 11 : i64} {
  func.func @kernel(%arg0: i32, %arg1: memref<96x32xf32, #tpu.memory_space<vmem>>, %arg2: memref<32x64xbf16, #tpu.memory_space<vmem>>, %arg3: memref<1x64xf32, #tpu.memory_space<vmem>>, %arg4: memref<64x64xbf16, #tpu.memory_space<vmem>>, %arg5: memref<1x64xf32, #tpu.memory_space<vmem>>, %arg6: memref<64x16xbf16, #tpu.memory_space<vmem>>, %arg7: memref<1x16xf32, #tpu.memory_space<vmem>>, %arg8: memref<96x16xf32, #tpu.memory_space<vmem>>) attributes {dimension_semantics = [#tpu.dimension_semantics<parallel>], iteration_bounds = array<i64: 1>, scalar_prefetch = 0 : i64, scratch_operands = 0 : i64, tpu.core_type = #tpu.core_type<tc>, window_params = [{transform_indices = @transform_0, window_bounds = array<i64: 96, 32>}, {pipeline_mode = #tpu.pipeline_mode<synchronous>, transform_indices = @transform_1, window_bounds = array<i64: 32, 64>}, {pipeline_mode = #tpu.pipeline_mode<synchronous>, transform_indices = @transform_2, window_bounds = array<i64: 1, 64>}, {pipeline_mode = #tpu.pipeline_mode<synchronous>, transform_indices = @transform_3, window_bounds = array<i64: 64, 64>}, {pipeline_mode = #tpu.pipeline_mode<synchronous>, transform_indices = @transform_4, window_bounds = array<i64: 1, 64>}, {pipeline_mode = #tpu.pipeline_mode<synchronous>, transform_indices = @transform_5, window_bounds = array<i64: 64, 16>}, {pipeline_mode = #tpu.pipeline_mode<synchronous>, transform_indices = @transform_6, window_bounds = array<i64: 1, 16>}, {transform_indices = @transform_7, window_bounds = array<i64: 96, 16>}]} {
    %c0 = arith.constant 0 : index
    %c0_0 = arith.constant 0 : index
    %0 = vector.load %arg1[%c0, %c0_0] : memref<96x32xf32, #tpu.memory_space<vmem>>, vector<96x32xf32>
    %1 = arith.truncf %0 : vector<96x32xf32> to vector<96x32xbf16>
    %c0_1 = arith.constant 0 : index
    %c0_2 = arith.constant 0 : index
    %2 = vector.load %arg2[%c0_1, %c0_2] : memref<32x64xbf16, #tpu.memory_space<vmem>>, vector<32x64xbf16>
    %cst = arith.constant dense<0.000000e+00> : vector<96x64xf32>
    %3 = tpu.matmul %1, %2, %cst {dimension_numbers = #tpu.dot_dimension_numbers<[1], [0], [0], [1], [0, 0, 1, 1], [], []>} : vector<96x32xbf16>, vector<32x64xbf16>, vector<96x64xf32> -> vector<96x64xf32>
    %c0_3 = arith.constant 0 : index
    %c0_4 = arith.constant 0 : index
    %4 = vector.load %arg3[%c0_3, %c0_4] : memref<1x64xf32, #tpu.memory_space<vmem>>, vector<1x64xf32>
    %5 = vector.broadcast %4 : vector<1x64xf32> to vector<96x64xf32>
    %6 = arith.addf %3, %5 : vector<96x64xf32>
    %7 = math.tanh %6 : vector<96x64xf32>
    %8 = arith.truncf %7 : vector<96x64xf32> to vector<96x64xbf16>
    %c0_5 = arith.constant 0 : index
    %c0_6 = arith.constant 0 : index
    %9 = vector.load %arg4[%c0_5, %c0_6] : memref<64x64xbf16, #tpu.memory_space<vmem>>, vector<64x64xbf16>
    %cst_7 = arith.constant dense<0.000000e+00> : vector<96x64xf32>
    %10 = tpu.matmul %8, %9, %cst_7 {dimension_numbers = #tpu.dot_dimension_numbers<[1], [0], [0], [1], [0, 0, 1, 1], [], []>} : vector<96x64xbf16>, vector<64x64xbf16>, vector<96x64xf32> -> vector<96x64xf32>
    %c0_8 = arith.constant 0 : index
    %c0_9 = arith.constant 0 : index
    %11 = vector.load %arg5[%c0_8, %c0_9] : memref<1x64xf32, #tpu.memory_space<vmem>>, vector<1x64xf32>
    %12 = vector.broadcast %11 : vector<1x64xf32> to vector<96x64xf32>
    %13 = arith.addf %10, %12 : vector<96x64xf32>
    %14 = math.tanh %13 : vector<96x64xf32>
    %15 = arith.truncf %14 : vector<96x64xf32> to vector<96x64xbf16>
    %c0_10 = arith.constant 0 : index
    %c0_11 = arith.constant 0 : index
    %16 = vector.load %arg6[%c0_10, %c0_11] : memref<64x16xbf16, #tpu.memory_space<vmem>>, vector<64x16xbf16>
    %cst_12 = arith.constant dense<0.000000e+00> : vector<96x16xf32>
    %17 = tpu.matmul %15, %16, %cst_12 {dimension_numbers = #tpu.dot_dimension_numbers<[1], [0], [0], [1], [0, 0, 1, 1], [], []>} : vector<96x64xbf16>, vector<64x16xbf16>, vector<96x16xf32> -> vector<96x16xf32>
    %c0_13 = arith.constant 0 : index
    %c0_14 = arith.constant 0 : index
    %18 = vector.load %arg7[%c0_13, %c0_14] : memref<1x16xf32, #tpu.memory_space<vmem>>, vector<1x16xf32>
    %19 = vector.broadcast %18 : vector<1x16xf32> to vector<96x16xf32>
    %20 = arith.addf %17, %19 : vector<96x16xf32>
    %c0_15 = arith.constant 0 : index
    %c0_16 = arith.constant 0 : index
    %21 = vector.load %arg8[%c0_15, %c0_16] : memref<96x16xf32, #tpu.memory_space<vmem>>, vector<96x16xf32>
    tpu.vector_store %arg8[%c0_15, %c0_16], %20 {strides = array<i32>} : memref<96x16xf32, #tpu.memory_space<vmem>>, vector<96x16xf32>,
    return
  }
  func.func @transform_0(%arg0: i32) -> (i32, i32) {
    %c0_i32 = arith.constant 0 : i32
    %c0_i32_0 = arith.constant 0 : i32
    return %arg0, %c0_i32 : i32, i32
  }
  func.func @transform_1(%arg0: i32) -> (i32, i32) {
    %c0_i32 = arith.constant 0 : i32
    %c0_i32_0 = arith.constant 0 : i32
    %c0_i32_1 = arith.constant 0 : i32
    return %c0_i32, %c0_i32_0 : i32, i32
  }
  func.func @transform_2(%arg0: i32) -> (i32, i32) {
    %c0_i32 = arith.constant 0 : i32
    %c0_i32_0 = arith.constant 0 : i32
    %c0_i32_1 = arith.constant 0 : i32
    return %c0_i32, %c0_i32_0 : i32, i32
  }
  func.func @transform_3(%arg0: i32) -> (i32, i32) {
    %c0_i32 = arith.constant 0 : i32
    %c0_i32_0 = arith.constant 0 : i32
    %c0_i32_1 = arith.constant 0 : i32
    return %c0_i32, %c0_i32_0 : i32, i32
  }
  func.func @transform_4(%arg0: i32) -> (i32, i32) {
    %c0_i32 = arith.constant 0 : i32
    %c0_i32_0 = arith.constant 0 : i32
    %c0_i32_1 = arith.constant 0 : i32
    return %c0_i32, %c0_i32_0 : i32, i32
  }
  func.func @transform_5(%arg0: i32) -> (i32, i32) {
    %c0_i32 = arith.constant 0 : i32
    %c0_i32_0 = arith.constant 0 : i32
    %c0_i32_1 = arith.constant 0 : i32
    return %c0_i32, %c0_i32_0 : i32, i32
  }
  func.func @transform_6(%arg0: i32) -> (i32, i32) {
    %c0_i32 = arith.constant 0 : i32
    %c0_i32_0 = arith.constant 0 : i32
    %c0_i32_1 = arith.constant 0 : i32
    return %c0_i32, %c0_i32_0 : i32, i32
  }
  func.func @transform_7(%arg0: i32) -> (i32, i32) {
    %c0_i32 = arith.constant 0 : i32
    %c0_i32_0 = arith.constant 0 : i32
    return %arg0, %c0_i32 : i32, i32
  }
}

</mosaic_0001>

<llo_original>
// kernel: condnet_forward.1
$region0: #{condnet_forward.1}
  #allocation0 [shape = 'u32[]', space=smem, size = 0x4, offset = 0x4, fixed_abs, tag = 'smem constant byte address 0x4 - core index']
  #allocation1 [shape = 'u32[144,128]{1,0:T(1,128)}', space=vmem, size = 0x12000, scoped, tag = 'internal scratch']
  %s0 = inlined_call_operand.vmem [shape: f32[96,32], index: 0, kind: input, shape index: {}]
  %s1 = inlined_call_operand.vmem [shape: bf16[32,64], index: 1, kind: input, shape index: {}]
  %s2 = inlined_call_operand.vmem [shape: f32[1,64], index: 2, kind: input, shape index: {}]
  %s3 = inlined_call_operand.vmem [shape: bf16[64,64], index: 3, kind: input, shape index: {}]
  %s4 = inlined_call_operand.vmem [shape: f32[1,64], index: 4, kind: input, shape index: {}]
  %s5 = inlined_call_operand.vmem [shape: bf16[64,16], index: 5, kind: input, shape index: {}]
  %s6 = inlined_call_operand.vmem [shape: f32[1,16], index: 6, kind: input, shape index: {}]
  %s7 = inlined_call_operand.vmem [shape: f32[96,16], index: 7, kind: output, shape index: {}]
  %s8 = sld [smem:[#allocation0]]
  $region38: #{condnet_forward.1} parent=0
    _
  %s10 = ssub.s32 1, %s8
  %s11 = scalar_select 0, %s10, %s8
  // Predicated region
  $region2: #{condnet_forward.1} parent=0 // pred_check
    _
  $region3: #{condnet_forward.1} parent=0 // pred_check_branch
    %13 = sbr.rel (0) target = $region5
  $region4: #{condnet_forward.1} parent=0 // pred_region
    _
  $region5: #{condnet_forward.1} parent=0 // pred_fallthru
    _
  // Predicated region
  $region6: #{condnet_forward.1} parent=0 // pred_check
    _
  $region7: #{condnet_forward.1} parent=0 // pred_check_branch
    %15 = sbr.rel (0) target = $region9
  $region8: #{condnet_forward.1} parent=0 // pred_region
    _
  $region9: #{condnet_forward.1} parent=0 // pred_fallthru
    _
  // Predicated region
  $region10: #{condnet_forward.1} parent=0 // pred_check
    _
  $region11: #{condnet_forward.1} parent=0 // pred_check_branch
    %17 = sbr.rel (0) target = $region13
  $region12: #{condnet_forward.1} parent=0 // pred_region
    _
  $region13: #{condnet_forward.1} parent=0 // pred_fallthru
    _
  // Predicated region
  $region14: #{condnet_forward.1} parent=0 // pred_check
    _
  $region15: #{condnet_forward.1} parent=0 // pred_check_branch
    %19 = sbr.rel (0) target = $region17
  $region16: #{condnet_forward.1} parent=0 // pred_region
    _
  $region17: #{condnet_forward.1} parent=0 // pred_fallthru
    _
  // Predicated region
  $region18: #{condnet_forward.1} parent=0 // pred_check
    _
  $region19: #{condnet_forward.1} parent=0 // pred_check_branch
    %21 = sbr.rel (0) target = $region21
  $region20: #{condnet_forward.1} parent=0 // pred_region
    _
  $region21: #{condnet_forward.1} parent=0 // pred_fallthru
    _
  // Predicated region
  $region22: #{condnet_forward.1} parent=0 // pred_check
    _
  $region23: #{condnet_forward.1} parent=0 // pred_check_branch
    %23 = sbr.rel (0) target = $region25
  $region24: #{condnet_forward.1} parent=0 // pred_region
    _
  $region25: #{condnet_forward.1} parent=0 // pred_fallthru
    _
  // Predicated region
  $region26: #{condnet_forward.1} parent=0 // pred_check
    _
  $region27: #{condnet_forward.1} parent=0 // pred_check_branch
    %25 = sbr.rel (0) target = $region29
  $region28: #{condnet_forward.1} parent=0 // pred_region
    _
  $region29: #{condnet_forward.1} parent=0 // pred_fallthru
    _
  %v27 = vld [vmem:[%s0] sm:$0xff]
  %v28 = vld [vmem:[%s0 + $0x8] sm:$0xff]
  %v29 = vld [vmem:[%s0 + $0x10] sm:$0xff]
  %v30 = vld [vmem:[%s0 + $0x18] sm:$0xff]
  %v31 = vld [vmem:[%s0 + $0x20] sm:$0xff]
  %v32 = vld [vmem:[%s0 + $0x28] sm:$0xff]
  %v33 = vld [vmem:[%s0 + $0x30] sm:$0xff]
  %v34 = vld [vmem:[%s0 + $0x38] sm:$0xff]
  %v35 = vld [vmem:[%s0 + $0x40] sm:$0xff]
  %v36 = vld [vmem:[%s0 + $0x48] sm:$0xff]
  %v37 = vld [vmem:[%s0 + $0x50] sm:$0xff]
  %v38 = vld [vmem:[%s0 + $0x58] sm:$0xff]
  %v39 = vpack.c.bf16 %v28, %v27
  %v40 = vpack.c.bf16 %v30, %v29
  %v41 = vpack.c.bf16 %v32, %v31
  %v42 = vpack.c.bf16 %v34, %v33
  %v43 = vpack.c.bf16 %v36, %v35
  %v44 = vpack.c.bf16 %v38, %v37
  %v45 = vld [vmem:[%s1] sm:$0xf]
  %v46 = vld [vmem:[%s1 + $0x4] sm:$0xf]
  %v47 = vld [vmem:[%s1 + $0x8] sm:$0xf]
  %v48 = vld [vmem:[%s1 + $0xc] sm:$0xf]
  %v49 = vld [vmem:[%s2] sm:$0x1]
  %v51 = vlaneseq
  %v52 = vshrl.u32 %v51, 7
  %v53 = vsub.s32 0, %v52
  %v54 = vrot.slane %v49, %v53
  %v60 = vunpack.c.l.b16 %v45
  %v61 = vunpack.c.l.b16 %v46
  %v62 = vunpack.c.l.b16 %v47
  %v63 = vunpack.c.l.b16 %v48
  %v64 = vpack.c.b16 %v61, %v60
  %v65 = vpack.c.b16 %v63, %v62
  %vm68 = vcmask 261120
  %v70 = vsel %vm68, %v39, 0
  %v73 = vsel %vm68, %v40, 0
  %v76 = vsel %vm68, %v41, 0
  %v79 = vsel %vm68, %v42, 0
  %v82 = vsel %vm68, %v43, 0
  %v85 = vsel %vm68, %v44, 0
  %87 = vmatprep.subr.bf16.mxu0 0
  %88 = vmatpush1.bf16.msra.mxu0 %v64
  %89 = vmatprep.subr.bf16.mxu0 0
  %90 = vmatpush1.bf16.msra.mxu0 %v65
  %91 = vmatprep.subr.bf16.mxu0 0
  %92 = vmatpush1.bf16.msra.mxu0 0
  %93 = vmatprep.subr.bf16.mxu0 0
  %94 = vmatpush1.bf16.msra.mxu0 0
  %95 = vmatprep.subr.bf16.mxu0 0
  %96 = vmatpush1.bf16.msra.mxu0 0
  %97 = vmatprep.subr.bf16.mxu0 0
  %98 = vmatpush1.bf16.msra.mxu0 0
  %99 = vmatprep.subr.bf16.mxu0 0
  %100 = vmatpush1.bf16.msra.mxu0 0
  %101 = vmatprep.subr.bf16.mxu0 0
  %102 = vmatpush1.bf16.msra.mxu0 0
  %103 = vmatprep.subr.bf16.mxu0 0
  %104 = vmatpush1.bf16.msra.mxu0 0
  %105 = vmatprep.subr.bf16.mxu0 0
  %106 = vmatpush1.bf16.msra.mxu0 0
  %107 = vmatprep.subr.bf16.mxu0 0
  %108 = vmatpush1.bf16.msra.mxu0 0
  %109 = vmatprep.subr.bf16.mxu0 0
  %110 = vmatpush1.bf16.msra.mxu0 0
  %111 = vmatprep.subr.bf16.mxu0 0
  %112 = vmatpush1.bf16.msra.mxu0 0
  %113 = vmatprep.subr.bf16.mxu0 0
  %114 = vmatpush1.bf16.msra.mxu0 0
  %115 = vmatprep.subr.bf16.mxu0 0
  %116 = vmatpush1.bf16.msra.mxu0 0
  %117 = vmatprep.subr.bf16.mxu0 0
  %118 = vmatpush1.bf16.msra.mxu0 0
  %119 = vmatprep.mubr.bf16.mxu0 0
  %120 = vmatmul.mubr.bf16.gmra.mrb[0].mxu0 %v70
  %v121 = vpop.f32.mrb[0].mxu0
  %v122 = vadd.f32 %v54, %v121
  %v123 = vpop.f32.mrb[0].mxu0
  %v124 = vpop.f32.mrb[0].mxu0
  %v125 = vadd.f32 %v54, %v124
  %v126 = vpop.f32.mrb[0].mxu0
  %127 = vmatprep.mubr.bf16.mxu0 0
  %128 = vmatmul.mubr.bf16.gmra.mrb[0].mxu0 %v73
  %v129 = vpop.f32.mrb[0].mxu0
  %v130 = vadd.f32 %v54, %v129
  %v131 = vpop.f32.mrb[0].mxu0
  %v132 = vpop.f32.mrb[0].mxu0
  %v133 = vadd.f32 %v54, %v132
  %v134 = vpop.f32.mrb[0].mxu0
  %135 = vmatprep.mubr.bf16.mxu0 0
  %136 = vmatmul.mubr.bf16.gmra.mrb[0].mxu0 %v76
  %v137 = vpop.f32.mrb[0].mxu0
  %v138 = vadd.f32 %v54, %v137
  %v139 = vpop.f32.mrb[0].mxu0
  %v140 = vpop.f32.mrb[0].mxu0
  %v141 = vadd.f32 %v54, %v140
  %v142 = vpop.f32.mrb[0].mxu0
  %143 = vmatprep.mubr.bf16.mxu0 0
  %144 = vmatmul.mubr.bf16.gmra.mrb[0].mxu0 %v79
  %v145 = vpop.f32.mrb[0].mxu0
  %v146 = vadd.f32 %v54, %v145
  %v147 = vpop.f32.mrb[0].mxu0
  %v148 = vpop.f32.mrb[0].mxu0
  %v149 = vadd.f32 %v54, %v148
  %v150 = vpop.f32.mrb[0].mxu0
  %151 = vmatprep.mubr.bf16.mxu0 0
  %152 = vmatmul.mubr.bf16.gmra.mrb[0].mxu0 %v82
  %v153 = vpop.f32.mrb[0].mxu0
  %v154 = vadd.f32 %v54, %v153
  %v155 = vpop.f32.mrb[0].mxu0
  %v156 = vpop.f32.mrb[0].mxu0
  %v157 = vadd.f32 %v54, %v156
  %v158 = vpop.f32.mrb[0].mxu0
  %159 = vmatprep.mubr.bf16.mxu0 0
  %160 = vmatmul.mubr.bf16.gmra.mrb[0].mxu0 %v85
  %v161 = vpop.f32.mrb[0].mxu0
  %v162 = vadd.f32 %v54, %v161
  %v163 = vpop.f32.mrb[0].mxu0
  %v164 = vpop.f32.mrb[0].mxu0
  %v165 = vadd.f32 %v54, %v164
  %v166 = vpop.f32.mrb[0].mxu0
  %167 = vdwg.mxu0
  %v168 = vtanh.pop %v122
  %v169 = vtanh.pop %v125
  %v170 = vtanh.pop %v130
  %v171 = vtanh.pop %v133
  %v172 = vtanh.pop %v138
  %v173 = vtanh.pop %v141
  %v174 = vtanh.pop %v146
  %v175 = vtanh.pop %v149
  %v176 = vtanh.pop %v154
  %v177 = vtanh.pop %v157
  %v178 = vtanh.pop %v162
  %v179 = vtanh.pop %v165
  %v180 = vpack.c.bf16 %v169, %v168
  %v181 = vpack.c.bf16 %v171, %v170
  %v182 = vpack.c.bf16 %v173, %v172
  %v183 = vpack.c.bf16 %v175, %v174
  %v184 = vpack.c.bf16 %v177, %v176
  %v185 = vpack.c.bf16 %v179, %v178
  %v186 = vld [vmem:[%s3] sm:$0xf]
  %v187 = vld [vmem:[%s3 + $0x4] sm:$0xf]
  %v188 = vld [vmem:[%s3 + $0x8] sm:$0xf]
  %v189 = vld [vmem:[%s3 + $0xc] sm:$0xf]
  %v190 = vld [vmem:[%s3 + $0x10] sm:$0xf]
  %v191 = vld [vmem:[%s3 + $0x14] sm:$0xf]
  %v192 = vld [vmem:[%s3 + $0x18] sm:$0xf]
  %v193 = vld [vmem:[%s3 + $0x1c] sm:$0xf]
  %v194 = vld [vmem:[%s4] sm:$0x1]
  %v196 = vlaneseq
  %v197 = vshrl.u32 %v196, 7
  %v198 = vsub.s32 0, %v197
  %v199 = vrot.slane %v194, %v198
  %v209 = vunpack.c.l.b16 %v186
  %v210 = vunpack.c.l.b16 %v187
  %v211 = vunpack.c.l.b16 %v188
  %v212 = vunpack.c.l.b16 %v189
  %v213 = vunpack.c.l.b16 %v190
  %v214 = vunpack.c.l.b16 %v191
  %v215 = vunpack.c.l.b16 %v192
  %v216 = vunpack.c.l.b16 %v193
  %v217 = vpack.c.b16 %v210, %v209
  %v218 = vpack.c.b16 %v212, %v211
  %v219 = vpack.c.b16 %v214, %v213
  %v220 = vpack.c.b16 %v216, %v215
  %vm225 = vcmask 523264
  %v227 = vsel %vm225, %v180, 0
  %v230 = vsel %vm225, %v181, 0
  %v233 = vsel %vm225, %v182, 0
  %v236 = vsel %vm225, %v183, 0
  %v239 = vsel %vm225, %v184, 0
  %v242 = vsel %vm225, %v185, 0
  %244 = vmatprep.subr.bf16.mxu0 0
  %245 = vmatpush1.bf16.msra.mxu0 %v217
  %246 = vmatprep.subr.bf16.mxu0 0
  %247 = vmatpush1.bf16.msra.mxu0 %v218
  %248 = vmatprep.subr.bf16.mxu0 0
  %249 = vmatpush1.bf16.msra.mxu0 %v219
  %250 = vmatprep.subr.bf16.mxu0 0
  %251 = vmatpush1.bf16.msra.mxu0 %v220
  %252 = vmatprep.subr.bf16.mxu0 0
  %253 = vmatpush1.bf16.msra.mxu0 0
  %254 = vmatprep.subr.bf16.mxu0 0
  %255 = vmatpush1.bf16.msra.mxu0 0
  %256 = vmatprep.subr.bf16.mxu0 0
  %257 = vmatpush1.bf16.msra.mxu0 0
  %258 = vmatprep.subr.bf16.mxu0 0
  %259 = vmatpush1.bf16.msra.mxu0 0
  %260 = vmatprep.subr.bf16.mxu0 0
  %261 = vmatpush1.bf16.msra.mxu0 0
  %262 = vmatprep.subr.bf16.mxu0 0
  %263 = vmatpush1.bf16.msra.mxu0 0
  %264 = vmatprep.subr.bf16.mxu0 0
  %265 = vmatpush1.bf16.msra.mxu0 0
  %266 = vmatprep.subr.bf16.mxu0 0
  %267 = vmatpush1.bf16.msra.mxu0 0
  %268 = vmatprep.subr.bf16.mxu0 0
  %269 = vmatpush1.bf16.msra.mxu0 0
  %270 = vmatprep.subr.bf16.mxu0 0
  %271 = vmatpush1.bf16.msra.mxu0 0
  %272 = vmatprep.subr.bf16.mxu0 0
  %273 = vmatpush1.bf16.msra.mxu0 0
  %274 = vmatprep.subr.bf16.mxu0 0
  %275 = vmatpush1.bf16.msra.mxu0 0
  %276 = vmatprep.mubr.bf16.mxu0 0
  %277 = vmatmul.mubr.bf16.gmra.mrb[0].mxu0 %v227
  %v278 = vpop.f32.mrb[0].mxu0
  %v279 = vadd.f32 %v199, %v278
  %v280 = vpop.f32.mrb[0].mxu0
  %v281 = vpop.f32.mrb[0].mxu0
  %v282 = vadd.f32 %v199, %v281
  %v283 = vpop.f32.mrb[0].mxu0
  %284 = vmatprep.mubr.bf16.mxu0 0
  %285 = vmatmul.mubr.bf16.gmra.mrb[0].mxu0 %v230
  %v286 = vpop.f32.mrb[0].mxu0
  %v287 = vadd.f32 %v199, %v286
  %v288 = vpop.f32.mrb[0].mxu0
  %v289 = vpop.f32.mrb[0].mxu0
  %v290 = vadd.f32 %v199, %v289
  %v291 = vpop.f32.mrb[0].mxu0
  %292 = vmatprep.mubr.bf16.mxu0 0
  %293 = vmatmul.mubr.bf16.gmra.mrb[0].mxu0 %v233
  %v294 = vpop.f32.mrb[0].mxu0
  %v295 = vadd.f32 %v199, %v294
  %v296 = vpop.f32.mrb[0].mxu0
  %v297 = vpop.f32.mrb[0].mxu0
  %v298 = vadd.f32 %v199, %v297
  %v299 = vpop.f32.mrb[0].mxu0
  %300 = vmatprep.mubr.bf16.mxu0 0
  %301 = vmatmul.mubr.bf16.gmra.mrb[0].mxu0 %v236
  %v302 = vpop.f32.mrb[0].mxu0
  %v303 = vadd.f32 %v199, %v302
  %v304 = vpop.f32.mrb[0].mxu0
  %v305 = vpop.f32.mrb[0].mxu0
  %v306 = vadd.f32 %v199, %v305
  %v307 = vpop.f32.mrb[0].mxu0
  %308 = vmatprep.mubr.bf16.mxu0 0
  %309 = vmatmul.mubr.bf16.gmra.mrb[0].mxu0 %v239
  %v310 = vpop.f32.mrb[0].mxu0
  %v311 = vadd.f32 %v199, %v310
  %v312 = vpop.f32.mrb[0].mxu0
  %v313 = vpop.f32.mrb[0].mxu0
  %v314 = vadd.f32 %v199, %v313
  %v315 = vpop.f32.mrb[0].mxu0
  %316 = vmatprep.mubr.bf16.mxu0 0
  %317 = vmatmul.mubr.bf16.gmra.mrb[0].mxu0 %v242
  %v318 = vpop.f32.mrb[0].mxu0
  %v319 = vadd.f32 %v199, %v318
  %v320 = vpop.f32.mrb[0].mxu0
  %v321 = vpop.f32.mrb[0].mxu0
  %v322 = vadd.f32 %v199, %v321
  %v323 = vpop.f32.mrb[0].mxu0
  %324 = vdwg.mxu0
  %v325 = vtanh.pop %v279
  %v326 = vtanh.pop %v282
  %v327 = vtanh.pop %v287
  %v328 = vtanh.pop %v290
  %v329 = vtanh.pop %v295
  %v330 = vtanh.pop %v298
  %v331 = vtanh.pop %v303
  %v332 = vtanh.pop %v306
  %v333 = vtanh.pop %v311
  %v334 = vtanh.pop %v314
  %v335 = vtanh.pop %v319
  %v336 = vtanh.pop %v322
  %v337 = vpack.c.bf16 %v326, %v325
  %v338 = vpack.c.bf16 %v328, %v327
  %v339 = vpack.c.bf16 %v330, %v329
  %v340 = vpack.c.bf16 %v332, %v331
  %v341 = vpack.c.bf16 %v334, %v333
  %v342 = vpack.c.bf16 %v336, %v335
  %v343 = vld [vmem:[%s5] sm:$0xf]
  %v344 = vld [vmem:[%s5 + $0x4] sm:$0xf]
  %v345 = vld [vmem:[%s5 + $0x8] sm:$0xf]
  %v346 = vld [vmem:[%s5 + $0xc] sm:$0xf]
  %v347 = vld [vmem:[%s5 + $0x10] sm:$0xf]
  %v348 = vld [vmem:[%s5 + $0x14] sm:$0xf]
  %v349 = vld [vmem:[%s5 + $0x18] sm:$0xf]
  %v350 = vld [vmem:[%s5 + $0x1c] sm:$0xf]
  %v351 = vld [vmem:[%s6] sm:$0x1]
  %v353 = vlaneseq
  %v354 = vshrl.u32 %v353, 7
  %v355 = vsub.s32 0, %v354
  %v356 = vrot.slane %v351, %v355
  %v366 = vunpack.c.l.b16 %v343
  %v367 = vunpack.c.l.b16 %v344
  %v368 = vunpack.c.l.b16 %v345
  %v369 = vunpack.c.l.b16 %v346
  %v370 = vunpack.c.l.b16 %v347
  %v371 = vunpack.c.l.b16 %v348
  %v372 = vunpack.c.l.b16 %v349
  %v373 = vunpack.c.l.b16 %v350
  %v374 = vpack.c.b16 %v367, %v366
  %v375 = vpack.c.b16 %v369, %v368
  %v376 = vpack.c.b16 %v371, %v370
  %v377 = vpack.c.b16 %v373, %v372
  %v383 = vsel %vm225, %v337, 0
  %v386 = vsel %vm225, %v338, 0
  %v389 = vsel %vm225, %v339, 0
  %v392 = vsel %vm225, %v340, 0
  %v395 = vsel %vm225, %v341, 0
  %v398 = vsel %vm225, %v342, 0
  %400 = vmatprep.subr.bf16.mxu0 0
  %401 = vmatpush1.bf16.msra.mxu0 %v374
  %402 = vmatprep.subr.bf16.mxu0 0
  %403 = vmatpush1.bf16.msra.mxu0 %v375
  %404 = vmatprep.subr.bf16.mxu0 0
  %405 = vmatpush1.bf16.msra.mxu0 %v376
  %406 = vmatprep.subr.bf16.mxu0 0
  %407 = vmatpush1.bf16.msra.mxu0 %v377
  %408 = vmatprep.subr.bf16.mxu0 0
  %409 = vmatpush1.bf16.msra.mxu0 0
  %410 = vmatprep.subr.bf16.mxu0 0
  %411 = vmatpush1.bf16.msra.mxu0 0
  %412 = vmatprep.subr.bf16.mxu0 0
  %413 = vmatpush1.bf16.msra.mxu0 0
  %414 = vmatprep.subr.bf16.mxu0 0
  %415 = vmatpush1.bf16.msra.mxu0 0
  %416 = vmatprep.subr.bf16.mxu0 0
  %417 = vmatpush1.bf16.msra.mxu0 0
  %418 = vmatprep.subr.bf16.mxu0 0
  %419 = vmatpush1.bf16.msra.mxu0 0
  %420 = vmatprep.subr.bf16.mxu0 0
  %421 = vmatpush1.bf16.msra.mxu0 0
  %422 = vmatprep.subr.bf16.mxu0 0
  %423 = vmatpush1.bf16.msra.mxu0 0
  %424 = vmatprep.subr.bf16.mxu0 0
  %425 = vmatpush1.bf16.msra.mxu0 0
  %426 = vmatprep.subr.bf16.mxu0 0
  %427 = vmatpush1.bf16.msra.mxu0 0
  %428 = vmatprep.subr.bf16.mxu0 0
  %429 = vmatpush1.bf16.msra.mxu0 0
  %430 = vmatprep.subr.bf16.mxu0 0
  %431 = vmatpush1.bf16.msra.mxu0 0
  %432 = vmatprep.mubr.bf16.mxu0 0
  %433 = vmatmul.mubr.bf16.gmra.mrb[0].mxu0 %v383
  %v434 = vpop.f32.mrb[0].mxu0
  %v435 = vadd.f32 %v356, %v434
  %v436 = vpop.f32.mrb[0].mxu0
  %v437 = vpop.f32.mrb[0].mxu0
  %v438 = vadd.f32 %v356, %v437
  %v439 = vpop.f32.mrb[0].mxu0
  %440 = vmatprep.mubr.bf16.mxu0 0
  %441 = vmatmul.mubr.bf16.gmra.mrb[0].mxu0 %v386
  %v442 = vpop.f32.mrb[0].mxu0
  %v443 = vadd.f32 %v356, %v442
  %v444 = vpop.f32.mrb[0].mxu0
  %v445 = vpop.f32.mrb[0].mxu0
  %v446 = vadd.f32 %v356, %v445
  %v447 = vpop.f32.mrb[0].mxu0
  %448 = vmatprep.mubr.bf16.mxu0 0
  %449 = vmatmul.mubr.bf16.gmra.mrb[0].mxu0 %v389
  %v450 = vpop.f32.mrb[0].mxu0
  %v451 = vadd.f32 %v356, %v450
  %v452 = vpop.f32.mrb[0].mxu0
  %v453 = vpop.f32.mrb[0].mxu0
  %v454 = vadd.f32 %v356, %v453
  %v455 = vpop.f32.mrb[0].mxu0
  %456 = vmatprep.mubr.bf16.mxu0 0
  %457 = vmatmul.mubr.bf16.gmra.mrb[0].mxu0 %v392
  %v458 = vpop.f32.mrb[0].mxu0
  %v459 = vadd.f32 %v356, %v458
  %v460 = vpop.f32.mrb[0].mxu0
  %v461 = vpop.f32.mrb[0].mxu0
  %v462 = vadd.f32 %v356, %v461
  %v463 = vpop.f32.mrb[0].mxu0
  %464 = vmatprep.mubr.bf16.mxu0 0
  %465 = vmatmul.mubr.bf16.gmra.mrb[0].mxu0 %v395
  %v466 = vpop.f32.mrb[0].mxu0
  %v467 = vadd.f32 %v356, %v466
  %v468 = vpop.f32.mrb[0].mxu0
  %v469 = vpop.f32.mrb[0].mxu0
  %v470 = vadd.f32 %v356, %v469
  %v471 = vpop.f32.mrb[0].mxu0
  %472 = vmatprep.mubr.bf16.mxu0 0
  %473 = vmatmul.mubr.bf16.gmra.mrb[0].mxu0 %v398
  %v474 = vpop.f32.mrb[0].mxu0
  %v475 = vadd.f32 %v356, %v474
  %v476 = vpop.f32.mrb[0].mxu0
  %v477 = vpop.f32.mrb[0].mxu0
  %v478 = vadd.f32 %v356, %v477
  %v479 = vpop.f32.mrb[0].mxu0
  %480 = vdwg.mxu0
  %vm481 = vcmask 130048
  %482 = vst.msk [vmem:[%s7] sm:$0xff] %vm481, %v435
  %483 = vst.msk [vmem:[%s7 + $0x8] sm:$0xff] %vm481, %v438
  %484 = vst.msk [vmem:[%s7 + $0x10] sm:$0xff] %vm481, %v443
  %485 = vst.msk [vmem:[%s7 + $0x18] sm:$0xff] %vm481, %v446
  %486 = vst.msk [vmem:[%s7 + $0x20] sm:$0xff] %vm481, %v451
  %487 = vst.msk [vmem:[%s7 + $0x28] sm:$0xff] %vm481, %v454
  %488 = vst.msk [vmem:[%s7 + $0x30] sm:$0xff] %vm481, %v459
  %489 = vst.msk [vmem:[%s7 + $0x38] sm:$0xff] %vm481, %v462
  %490 = vst.msk [vmem:[%s7 + $0x40] sm:$0xff] %vm481, %v467
  %491 = vst.msk [vmem:[%s7 + $0x48] sm:$0xff] %vm481, %v470
  %492 = vst.msk [vmem:[%s7 + $0x50] sm:$0xff] %vm481, %v475
  %493 = vst.msk [vmem:[%s7 + $0x58] sm:$0xff] %vm481, %v478
  // Predicated region
  $region30: #{condnet_forward.1} parent=0 // pred_check
    _
  $region31: #{condnet_forward.1} parent=0 // pred_check_branch
    %495 = sbr.rel (0) target = $region33
  $region32: #{condnet_forward.1} parent=0 // pred_region
    _
  $region33: #{condnet_forward.1} parent=0 // pred_fallthru
    _
  // Predicated region
  $region34: #{condnet_forward.1} parent=0 // pred_check
    _
  $region35: #{condnet_forward.1} parent=0 // pred_check_branch
    %497 = sbr.rel (0) target = $region37
  $region36: #{condnet_forward.1} parent=0 // pred_region
    _
  $region37: #{condnet_forward.1} parent=0 // pred_fallthru
    _

</llo_original>
